<compile_context>
chip_gen: v5e
topology: v5e:2x2
jax: 0.10.0
libtpu: 0.0.40
codegen_flags: <defaults>
</compile_context>

<pallas_src>
import functools

import jax
import jax.numpy as jnp
from jax.experimental import pallas as pl
from jax.experimental.pallas import tpu as pltpu

LANE = 128                         # vreg lane width
PACK_SUB = 32                      # sublane multiple covering f32(8)/bf16(16)/int8(32)
MAX_BLOCK_ELEMS = 2048 * 128       # ~1 MiB f32 physical per block
VMEM_LIMIT = 32 * 1024 * 1024
RESIDENT_MAX_BYTES = 24 * 1024 * 1024   # VMEM footprint budget for the one-pass path


def _round_up(a, b):
    return ((a + b - 1) // b) * b


# ---------------------------------------------------------------------------
# Shape plumbing: zero-copy 2-D slab
# ---------------------------------------------------------------------------
def _as_2d(x):
    """Return (x2d, n_valid, padded). Zero-copy reshape in all practical cases."""
    n = x.size
    if n == 0:
        raise ValueError("empty input")
    if n % LANE == 0:
        return x.reshape(n // LANE, LANE), n, False          # lane-dense, free reshape
    if x.ndim == 0:
        return x.reshape(1, 1), 1, False
    last = x.shape[-1]
    # Collapsed (rows, last) blocks are lane-padded to round_up(last,128) in VMEM; only
    # fall back to a padded copy when even a minimal block would blow the VMEM budget.
    if _round_up(last, LANE) * PACK_SUB * 4 <= 8 * 1024 * 1024:
        return x.reshape(n // last, last), n, False          # free reshape, no pad
    # Pathological (e.g. giant ragged 1-D tensor): single edge pad (min/max neutral).
    rows = _round_up(pl.cdiv(n, LANE), PACK_SUB)
    flat = jnp.pad(x.reshape(-1), (0, rows * LANE - n), mode="edge")
    return flat.reshape(rows, LANE), n, True


def _choose_block_rows(rows, cols):
    padded_cols = _round_up(cols, LANE)                      # physical lane footprint
    br = max(PACK_SUB, (MAX_BLOCK_ELEMS // padded_cols) // PACK_SUB * PACK_SUB)
    if br >= rows:
        return rows                                          # full dim (layout-exempt)
    return br


# ---------------------------------------------------------------------------
# Kernel 1 (tiled path): grid-accumulated min/max + in-kernel EMA + scale finish
# ---------------------------------------------------------------------------
def _minmax_scale_kernel(min_buf_ref, max_buf_ref, x_ref,
                         scale_ref, inv_ref, nmin_ref, nmax_ref,
                         min_acc, max_acc,
                         *, total_rows, block_rows, momentum, qmin, qmax):
    i = pl.program_id(0)

    @pl.when(i == 0)
    def _():
        min_acc[...] = jnp.full((1, 1), jnp.inf, jnp.float32)
        max_acc[...] = jnp.full((1, 1), -jnp.inf, jnp.float32)

    x = x_ref[...].astype(jnp.float32)
    if total_rows % block_rows != 0:
        # Ragged last block: rows past the array end are undefined -> mask with
        # the min/max identities.
        row_ids = jax.lax.broadcasted_iota(jnp.int32, x.shape, 0)
        valid = row_ids < (total_rows - i * block_rows)
        x_min = jnp.where(valid, x, jnp.inf)
        x_max = jnp.where(valid, x, -jnp.inf)
    else:
        x_min = x
        x_max = x

    # Sublane-direction reduce first (mostly elementwise VPU), then one lane reduce.
    blk_min = jnp.min(jnp.min(x_min, axis=0, keepdims=True), axis=1, keepdims=True)
    blk_max = jnp.max(jnp.max(x_max, axis=0, keepdims=True), axis=1, keepdims=True)
    min_acc[...] = jnp.minimum(min_acc[...], blk_min)
    max_acc[...] = jnp.maximum(max_acc[...], blk_max)

    @pl.when(i == pl.num_programs(0) - 1)
    def _():
        gmin = min_acc[...]                       # (1,1)
        gmax = max_acc[...]
        mn_b = min_buf_ref[0]                     # SMEM scalars (running buffers)
        mx_b = max_buf_ref[0]
        # first-batch detection (buffers equal) -> take the data min/max directly
        w = (mn_b == mx_b).astype(jnp.float32)
        new_min = w * gmin + (1.0 - w) * (mn_b + momentum * (gmin - mn_b))
        new_max = w * gmax + (1.0 - w) * (mx_b + momentum * (gmax - mx_b))
        mn = jnp.minimum(new_min, 0.0)
        mx = jnp.maximum(new_max, 0.0)
        max_range = jnp.maximum(-mn, mx)
        scale = jnp.where(mx == mn, 1.0,
                          jnp.maximum(max_range / ((qmax - qmin) / 2.0), 1e-8))
        nmin_ref[...] = new_min
        nmax_ref[...] = new_max
        scale_ref[...] = scale
        inv_ref[...] = 1.0 / scale


# ---------------------------------------------------------------------------
# Kernel 2 (tiled path): elementwise fake-quantize, scale resident as (1,1) blocks
# ---------------------------------------------------------------------------
def _quantize_kernel(scale_ref, inv_ref, x_ref, o_ref, *, qmin, qmax):
    # NOTE: on a ragged last row-block the out-of-bounds rows of x_ref are undefined;
    # everything here is elementwise, so garbage cannot contaminate valid rows, and
    # Pallas' clipped partial-block write-back discards the out-of-bounds results.
    s = scale_ref[...]                            # (1,1) -> broadcast
    inv_s = inv_ref[...]                          # multiply instead of divide
    x = x_ref[...].astype(jnp.float32)            # in-vreg upcast, native-dtype load
    q = jnp.clip(jnp.round(x * inv_s), qmin, qmax)
    o_ref[...] = (q * s).astype(o_ref.dtype)


# ---------------------------------------------------------------------------
# Kernel 3 (resident one-pass path): min/max + EMA + scale + quantize, 1R + 1W
# ---------------------------------------------------------------------------
def _resident_quant_kernel(min_buf_ref, max_buf_ref, x_ref,
                           o_ref, nmin_ref, nmax_ref,
                           *, momentum, qmin, qmax):
    x = x_ref[...].astype(jnp.float32)
    gmin = jnp.min(jnp.min(x, axis=0, keepdims=True), axis=1, keepdims=True)
    gmax = jnp.max(jnp.max(x, axis=0, keepdims=True), axis=1, keepdims=True)
    mn_b = min_buf_ref[0]
    mx_b = max_buf_ref[0]
    w = (mn_b == mx_b).astype(jnp.float32)
    new_min = w * gmin + (1.0 - w) * (mn_b + momentum * (gmin - mn_b))
    new_max = w * gmax + (1.0 - w) * (mx_b + momentum * (gmax - mx_b))
    mn = jnp.minimum(new_min, 0.0)
    mx = jnp.maximum(new_max, 0.0)
    max_range = jnp.maximum(-mn, mx)
    scale = jnp.where(mx == mn, 1.0,
                      jnp.maximum(max_range / ((qmax - qmin) / 2.0), 1e-8))
    inv_s = 1.0 / scale
    q = jnp.clip(jnp.round(x * inv_s), qmin, qmax)
    o_ref[...] = (q * scale).astype(o_ref.dtype)
    nmin_ref[...] = new_min
    nmax_ref[...] = new_max


# ---------------------------------------------------------------------------
# pallas_call wrappers
# ---------------------------------------------------------------------------
def _minmax_scale_pallas(x2d, min_buf, max_buf, momentum, qmin, qmax, block_rows):
    rows, cols = x2d.shape
    grid = pl.cdiv(rows, block_rows)
    kern = functools.partial(_minmax_scale_kernel, total_rows=rows,
                             block_rows=block_rows, momentum=momentum,
                             qmin=qmin, qmax=qmax)
    one = jax.ShapeDtypeStruct((1, 1), jnp.float32)
    one_spec = pl.BlockSpec((1, 1), lambda i: (0, 0))
    return pl.pallas_call(
        kern,
        out_shape=(one, one, one, one),           # scale, 1/scale, new_min, new_max
        grid=(grid,),
        in_specs=[
            pl.BlockSpec(memory_space=pltpu.SMEM),                    # min buffer (1,)
            pl.BlockSpec(memory_space=pltpu.SMEM),                    # max buffer (1,)
            pl.BlockSpec((block_rows, cols), lambda i: (i, 0)),       # input tile
        ],
        out_specs=(one_spec, one_spec, one_spec, one_spec),
        scratch_shapes=[pltpu.VMEM((1, 1), jnp.float32),
                        pltpu.VMEM((1, 1), jnp.float32)],
        compiler_params=pltpu.CompilerParams(
            dimension_semantics=("arbitrary",),   # grid accumulation
            vmem_limit_bytes=VMEM_LIMIT,
        ),
    )(min_buf, max_buf, x2d)


def _quantize_pallas(x2d, scale11, inv11, qmin, qmax, block_rows):
    rows, cols = x2d.shape
    grid = pl.cdiv(rows, block_rows)
    kern = functools.partial(_quantize_kernel, qmin=qmin, qmax=qmax)
    one_spec = pl.BlockSpec((1, 1), lambda i: (0, 0))
    return pl.pallas_call(
        kern,
        out_shape=jax.ShapeDtypeStruct(x2d.shape, x2d.dtype),
        grid=(grid,),
        in_specs=[
            one_spec,                                                 # scale (1,1)
            one_spec,                                                 # 1/scale (1,1)
            pl.BlockSpec((block_rows, cols), lambda i: (i, 0)),       # input tile
        ],
        out_specs=pl.BlockSpec((block_rows, cols), lambda i: (i, 0)),
        compiler_params=pltpu.CompilerParams(
            dimension_semantics=("parallel",),
            vmem_limit_bytes=VMEM_LIMIT,
        ),
    )(scale11, inv11, x2d)


def _resident_pallas(x2d, min_buf, max_buf, momentum, qmin, qmax):
    rows, cols = x2d.shape
    kern = functools.partial(_resident_quant_kernel, momentum=momentum,
                             qmin=qmin, qmax=qmax)
    one = jax.ShapeDtypeStruct((1, 1), jnp.float32)
    one_spec = pl.BlockSpec((1, 1), lambda i: (0, 0))
    full_spec = pl.BlockSpec((rows, cols), lambda i: (0, 0))
    return pl.pallas_call(
        kern,
        out_shape=(jax.ShapeDtypeStruct(x2d.shape, x2d.dtype), one, one),
        grid=(1,),
        in_specs=[
            pl.BlockSpec(memory_space=pltpu.SMEM),
            pl.BlockSpec(memory_space=pltpu.SMEM),
            full_spec,
        ],
        out_specs=(full_spec, one_spec, one_spec),
        compiler_params=pltpu.CompilerParams(
            dimension_semantics=("arbitrary",),
            vmem_limit_bytes=VMEM_LIMIT,
        ),
    )(min_buf, max_buf, x2d)


# ---------------------------------------------------------------------------
# Functional equivalent of Quant.forward
# ---------------------------------------------------------------------------
def quant_forward(x, min_buf, max_buf, num_bits=8, momentum=0.01, training=True,
                  resident_max_bytes=RESIDENT_MAX_BYTES):
    """training == (self.training or self.warmup or isInit) in the torch module."""
    qmin = -(2.0 ** num_bits) / 2.0
    qmax = -qmin - 1.0

    x2d, n, padded = _as_2d(x)
    rows, cols = x2d.shape
    block_rows = _choose_block_rows(rows, cols)
    min_buf32 = min_buf.astype(jnp.float32).reshape(1)
    max_buf32 = max_buf.astype(jnp.float32).reshape(1)

    if training:
        # Physical (lane-padded) VMEM footprint estimate: in + out buffers (double
        # buffered) + f32 temporaries.
        phys_elems = rows * _round_up(cols, LANE)
        footprint = phys_elems * (4 * x2d.dtype.itemsize + 16)
        if (not padded) and footprint <= resident_max_bytes:
            # One pass: 1 HBM read + 1 HBM write, zero XLA glue.
            out2d, nmin, nmax = _resident_pallas(
                x2d, min_buf32, max_buf32, momentum, qmin, qmax)
            return out2d.reshape(x.shape), nmin.reshape(1), nmax.reshape(1)
        # Two streaming passes for large tensors.
        scale11, inv11, nmin, nmax = _minmax_scale_pallas(
            x2d, min_buf32, max_buf32, momentum, qmin, qmax, block_rows)
        new_min = nmin.reshape(1)
        new_max = nmax.reshape(1)
    else:
        new_min = min_buf32
        new_max = max_buf32
        mn = jnp.minimum(0.0, new_min[0])
        mx = jnp.maximum(0.0, new_max[0])
        scale = jnp.where(mx == mn, 1.0,
                          jnp.maximum(jnp.maximum(-mn, mx) / ((qmax - qmin) / 2.0),
                                      1e-8))
        scale11 = jnp.reshape(scale, (1, 1)).astype(jnp.float32)
        inv11 = jnp.reshape(1.0 / scale, (1, 1)).astype(jnp.float32)

    out2d = _quantize_pallas(x2d, scale11, inv11, qmin, qmax, block_rows)
    if padded:
        out = out2d.reshape(-1)[:n].reshape(x.shape)
    else:
        out = out2d.reshape(x.shape)
    return out, new_min, new_max


# ---------------------------------------------------------------------------
# Pure-JAX reference (torch-faithful: divide by scale) for correctness checks.
# ---------------------------------------------------------------------------
def _quant_ref(x, min_buf, max_buf, num_bits=8, momentum=0.01):
    xf = x.astype(jnp.float32)
    dmin, dmax = jnp.min(xf), jnp.max(xf)
    same = min_buf[0] == max_buf[0]
    new_min = jnp.where(same, dmin, min_buf[0] + momentum * (dmin - min_buf[0]))
    new_max = jnp.where(same, dmax, max_buf[0] + momentum * (dmax - max_buf[0]))
    qmin = -(2.0 ** num_bits) / 2.0
    qmax = -qmin - 1.0
    mn = jnp.minimum(0.0, new_min)
    mx = jnp.maximum(0.0, new_max)
    scale = jnp.where(
        mx == mn, 1.0, jnp.maximum(jnp.maximum(-mn, mx) / ((qmax - qmin) / 2.0), 1e-8))
    out = (jnp.clip(jnp.round(xf / scale), qmin, qmax) * scale).astype(x.dtype)
    return out, new_min, new_max, scale


def _check(out, ref_out, scale, name):
    diff = jnp.abs(out.astype(jnp.float32) - ref_out.astype(jnp.float32))
    max_diff = float(jnp.max(diff))
    exact_frac = float(jnp.mean((diff <= 1e-6).astype(jnp.float32)))
    # Kernel multiplies by 1/scale while torch divides by scale; this can only flip
    # round() on exact .5 ties (<= one quantization step, vanishing fraction).
    assert max_diff <= float(scale) * 1.001 + 1e-6, (name, max_diff, float(scale))
    assert exact_frac >= 0.99, (name, exact_frac)


if __name__ == "__main__":
    key = jax.random.PRNGKey(0)
    k1, k2, k3, k4, k5 = jax.random.split(key, 5)

    min_buf = jnp.zeros((1,), jnp.float32)   # Quant.__init__ buffers
    max_buf = jnp.zeros((1,), jnp.float32)

    # --- Test 1: NCHW f32, 128-aligned numel -> VMEM-resident one-pass path.
    x1 = jax.random.normal(k1, (2, 4, 16, 16), dtype=jnp.float32) * 3.0
    out1, nmin1, nmax1 = quant_forward(x1, min_buf, max_buf)
    jax.block_until_ready((out1, nmin1, nmax1))
    r_out, r_min, r_max, r_scale = _quant_ref(x1, min_buf, max_buf)
    assert out1.shape == x1.shape and out1.dtype == x1.dtype
    _check(out1, r_out, r_scale, "resident_aligned_f32")
    assert jnp.allclose(nmin1[0], r_min, atol=1e-6)
    assert jnp.allclose(nmax1[0], r_max, atol=1e-6)

    # --- Test 2: ragged bf16 input -> zero-copy collapsed (15,7) slab, resident path.
    x2 = (jax.random.normal(k2, (3, 5, 7), dtype=jnp.float32) * 2.0).astype(jnp.bfloat16)
    out2, nmin2, nmax2 = quant_forward(x2, min_buf, max_buf)
    jax.block_until_ready((out2, nmin2, nmax2))
    r_out, r_min, r_max, r_scale = _quant_ref(x2, min_buf, max_buf)
    assert out2.shape == x2.shape and out2.dtype == x2.dtype
    _check(out2, r_out, r_scale, "resident_ragged_bf16")
    assert jnp.allclose(nmin2[0], r_min, atol=1e-6)
    assert jnp.allclose(nmax2[0], r_max, atol=1e-6)

    # --- Test 3: aligned f32, forced tiled path (grid accumulation + parallel quantize).
    x3 = jax.random.normal(k3, (8, 8, 64, 128), dtype=jnp.float32) * 1.5
    out3, nmin3, nmax3 = quant_forward(x3, min_buf, max_buf, resident_max_bytes=0)
    jax.block_until_ready((out3, nmin3, nmax3))
    r_out, r_min, r_max, r_scale = _quant_ref(x3, min_buf, max_buf)
    _check(out3, r_out, r_scale, "tiled_aligned_f32")
    assert jnp.allclose(nmin3[0], r_min, atol=1e-6)
    assert jnp.allclose(nmax3[0], r_max, atol=1e-6)

    # --- Test 4: ragged f32, forced tiled path (partial last row-block masking).
    x4 = jax.random.normal(k4, (7, 13, 33, 100), dtype=jnp.float32) * 2.5
    out4, nmin4, nmax4 = quant_forward(x4, min_buf, max_buf, resident_max_bytes=0)
    jax.block_until_ready((out4, nmin4, nmax4))
    r_out, r_min, r_max, r_scale = _quant_ref(x4, min_buf, max_buf)
    _check(out4, r_out, r_scale, "tiled_ragged_f32")
    assert jnp.allclose(nmin4[0], r_min, atol=1e-6)
    assert jnp.allclose(nmax4[0], r_max, atol=1e-6)

    # --- Test 5: eval path (buffers fixed, quantize-only kernel).
    mb = jnp.array([-2.5], jnp.float32)
    Mb = jnp.array([3.0], jnp.float32)
    x5 = jax.random.normal(k5, (2, 4, 16, 16), dtype=jnp.float32)
    out5, m5, M5 = quant_forward(x5, mb, Mb, training=False)
    jax.block_until_ready((out5, m5, M5))
    mn5 = jnp.minimum(0.0, mb[0])
    mx5 = jnp.maximum(0.0, Mb[0])
    scale5 = jnp.maximum(jnp.maximum(-mn5, mx5) / 127.5, 1e-8)
    ref5 = (jnp.clip(jnp.round(x5 / scale5), -128.0, 127.0) * scale5).astype(x5.dtype)
    _check(out5, ref5, scale5, "eval_path")
    assert jnp.allclose(m5[0], mb[0]) and jnp.allclose(M5[0], Mb[0])

    print("KERNEL_OK")
</pallas_src>

<mosaic_0001>
module attributes {stable_mosaic.version = 11 : i64} {
  func.func @_resident_quant_kernel(%arg0: i32, %arg1: memref<1xf32, #tpu.memory_space<smem>>, %arg2: memref<1xf32, #tpu.memory_space<smem>>, %arg3: memref<16x128xf32, #tpu.memory_space<vmem>>, %arg4: memref<16x128xf32, #tpu.memory_space<vmem>>, %arg5: memref<1x1xf32, #tpu.memory_space<vmem>>, %arg6: memref<1x1xf32, #tpu.memory_space<vmem>>) attributes {dimension_semantics = [#tpu.dimension_semantics<arbitrary>], iteration_bounds = array<i64: 1>, scalar_prefetch = 0 : i64, scratch_operands = 0 : i64, tpu.core_type = #tpu.core_type<tc>, window_params = [{transform_indices = @transform_0, window_bounds = array<i64: 1>}, {transform_indices = @transform_1, window_bounds = array<i64: 1>}, {pipeline_mode = #tpu.pipeline_mode<synchronous>, transform_indices = @transform_2, window_bounds = array<i64: 16, 128>}, {pipeline_mode = #tpu.pipeline_mode<synchronous>, transform_indices = @transform_3, window_bounds = array<i64: 16, 128>}, {pipeline_mode = #tpu.pipeline_mode<synchronous>, transform_indices = @transform_4, window_bounds = array<i64: 1, 1>}, {pipeline_mode = #tpu.pipeline_mode<synchronous>, transform_indices = @transform_5, window_bounds = array<i64: 1, 1>}]} {
    %c0 = arith.constant 0 : index
    %c0_0 = arith.constant 0 : index
    %0 = vector.load %arg3[%c0, %c0_0] : memref<16x128xf32, #tpu.memory_space<vmem>>, vector<16x128xf32>
    %cst = arith.constant dense<0x7F800000> : vector<128xf32>
    %1 = vector.multi_reduction <minimumf>, %0, %cst [0] : vector<16x128xf32> to vector<128xf32>
    %2 = vector.shape_cast %1 : vector<128xf32> to vector<1x128xf32>
    %cst_1 = arith.constant dense<0x7F800000> : vector<1xf32>
    %3 = vector.multi_reduction <minimumf>, %2, %cst_1 [1] : vector<1x128xf32> to vector<1xf32>
    %4 = vector.shape_cast %3 : vector<1xf32> to vector<1x1xf32>
    %cst_2 = arith.constant dense<0xFF800000> : vector<128xf32>
    %5 = vector.multi_reduction <maximumf>, %0, %cst_2 [0] : vector<16x128xf32> to vector<128xf32>
    %6 = vector.shape_cast %5 : vector<128xf32> to vector<1x128xf32>
    %cst_3 = arith.constant dense<0xFF800000> : vector<1xf32>
    %7 = vector.multi_reduction <maximumf>, %6, %cst_3 [1] : vector<1x128xf32> to vector<1xf32>
    %8 = vector.shape_cast %7 : vector<1xf32> to vector<1x1xf32>
    %c0_4 = arith.constant 0 : index
    %9 = memref.load %arg1[%c0_4] : memref<1xf32, #tpu.memory_space<smem>>
    %c0_5 = arith.constant 0 : index
    %10 = memref.load %arg2[%c0_5] : memref<1xf32, #tpu.memory_space<smem>>
    %11 = arith.cmpf oeq, %9, %10 : f32
    %12 = arith.extui %11 : i1 to i32
    %13 = arith.sitofp %12 : i32 to f32
    %14 = vector.broadcast %13 : f32 to vector<1x1xf32>
    %15 = arith.mulf %14, %4 : vector<1x1xf32>
    %cst_6 = arith.constant 1.000000e+00 : f32
    %16 = arith.subf %cst_6, %13 : f32
    %17 = vector.broadcast %9 : f32 to vector<1x1xf32>
    %18 = arith.subf %4, %17 : vector<1x1xf32>
    %cst_7 = arith.constant 0.00999999977 : f32
    %19 = vector.broadcast %cst_7 : f32 to vector<1x1xf32>
    %20 = arith.mulf %19, %18 : vector<1x1xf32>
    %21 = vector.broadcast %9 : f32 to vector<1x1xf32>
    %22 = arith.addf %21, %20 : vector<1x1xf32>
    %23 = vector.broadcast %16 : f32 to vector<1x1xf32>
    %24 = arith.mulf %23, %22 : vector<1x1xf32>
    %25 = arith.addf %15, %24 : vector<1x1xf32>
    %26 = vector.broadcast %13 : f32 to vector<1x1xf32>
    %27 = arith.mulf %26, %8 : vector<1x1xf32>
    %cst_8 = arith.constant 1.000000e+00 : f32
    %28 = arith.subf %cst_8, %13 : f32
    %29 = vector.broadcast %10 : f32 to vector<1x1xf32>
    %30 = arith.subf %8, %29 : vector<1x1xf32>
    %cst_9 = arith.constant 0.00999999977 : f32
    %31 = vector.broadcast %cst_9 : f32 to vector<1x1xf32>
    %32 = arith.mulf %31, %30 : vector<1x1xf32>
    %33 = vector.broadcast %10 : f32 to vector<1x1xf32>
    %34 = arith.addf %33, %32 : vector<1x1xf32>
    %35 = vector.broadcast %28 : f32 to vector<1x1xf32>
    %36 = arith.mulf %35, %34 : vector<1x1xf32>
    %37 = arith.addf %27, %36 : vector<1x1xf32>
    %cst_10 = arith.constant 0.000000e+00 : f32
    %38 = vector.broadcast %cst_10 : f32 to vector<1x1xf32>
    %39 = arith.minimumf %25, %38 : vector<1x1xf32>
    %cst_11 = arith.constant 0.000000e+00 : f32
    %40 = vector.broadcast %cst_11 : f32 to vector<1x1xf32>
    %41 = arith.maximumf %37, %40 : vector<1x1xf32>
    %cst_12 = arith.constant 0.000000e+00 : f32
    %42 = vector.broadcast %cst_12 : f32 to vector<1x1xf32>
    %43 = arith.subf %42, %39 : vector<1x1xf32>
    %44 = arith.maximumf %43, %41 : vector<1x1xf32>
    %45 = arith.cmpf oeq, %41, %39 : vector<1x1xf32>
    %cst_13 = arith.constant 1.275000e+02 : f32
    %46 = vector.broadcast %cst_13 : f32 to vector<1x1xf32>
    %47 = arith.divf %44, %46 : vector<1x1xf32>
    %cst_14 = arith.constant 9.99999993E-9 : f32
    %48 = vector.broadcast %cst_14 : f32 to vector<1x1xf32>
    %49 = arith.maximumf %47, %48 : vector<1x1xf32>
    %cst_15 = arith.constant 1.000000e+00 : f32
    %50 = vector.broadcast %cst_15 : f32 to vector<1x1xf32>
    %51 = arith.select %45, %50, %49 : vector<1x1xi1>, vector<1x1xf32>
    %cst_16 = arith.constant 1.000000e+00 : f32
    %52 = vector.broadcast %cst_16 : f32 to vector<1x1xf32>
    %53 = arith.divf %52, %51 : vector<1x1xf32>
    %54 = vector.broadcast %53 : vector<1x1xf32> to vector<16x128xf32>
    %55 = arith.mulf %0, %54 : vector<16x128xf32>
    %56 = math.roundeven %55 : vector<16x128xf32>
    %cst_17 = arith.constant -1.280000e+02 : f32
    %cst_18 = arith.constant 1.270000e+02 : f32
    %57 = vector.broadcast %cst_17 : f32 to vector<16x128xf32>
    %58 = arith.maximumf %57, %56 : vector<16x128xf32>
    %59 = vector.broadcast %cst_18 : f32 to vector<16x128xf32>
    %60 = arith.minimumf %59, %58 : vector<16x128xf32>
    %61 = vector.broadcast %51 : vector<1x1xf32> to vector<16x128xf32>
    %62 = arith.mulf %60, %61 : vector<16x128xf32>
    %c0_19 = arith.constant 0 : index
    %c0_20 = arith.constant 0 : index
    %63 = vector.load %arg4[%c0_19, %c0_20] : memref<16x128xf32, #tpu.memory_space<vmem>>, vector<16x128xf32>
    tpu.vector_store %arg4[%c0_19, %c0_20], %62 {strides = array<i32>} : memref<16x128xf32, #tpu.memory_space<vmem>>, vector<16x128xf32>,
    %c0_21 = arith.constant 0 : index
    %c0_22 = arith.constant 0 : index
    %64 = vector.load %arg5[%c0_21, %c0_22] : memref<1x1xf32, #tpu.memory_space<vmem>>, vector<1x1xf32>
    tpu.vector_store %arg5[%c0_21, %c0_22], %25 {strides = array<i32>} : memref<1x1xf32, #tpu.memory_space<vmem>>, vector<1x1xf32>,
    %c0_23 = arith.constant 0 : index
    %c0_24 = arith.constant 0 : index
    %65 = vector.load %arg6[%c0_23, %c0_24] : memref<1x1xf32, #tpu.memory_space<vmem>>, vector<1x1xf32>
    tpu.vector_store %arg6[%c0_23, %c0_24], %37 {strides = array<i32>} : memref<1x1xf32, #tpu.memory_space<vmem>>, vector<1x1xf32>,
    return
  }
  func.func @transform_0(%arg0: i32) -> i32 {
    %c0_i32 = arith.constant 0 : i32
    %c0_i32_0 = arith.constant 0 : i32
    return %c0_i32 : i32
  }
  func.func @transform_1(%arg0: i32) -> i32 {
    %c0_i32 = arith.constant 0 : i32
    %c0_i32_0 = arith.constant 0 : i32
    return %c0_i32 : i32
  }
  func.func @transform_2(%arg0: i32) -> (i32, i32) {
    %c0_i32 = arith.constant 0 : i32
    %c0_i32_0 = arith.constant 0 : i32
    %c0_i32_1 = arith.constant 0 : i32
    return %c0_i32, %c0_i32_0 : i32, i32
  }
  func.func @transform_3(%arg0: i32) -> (i32, i32) {
    %c0_i32 = arith.constant 0 : i32
    %c0_i32_0 = arith.constant 0 : i32
    %c0_i32_1 = arith.constant 0 : i32
    return %c0_i32, %c0_i32_0 : i32, i32
  }
  func.func @transform_4(%arg0: i32) -> (i32, i32) {
    %c0_i32 = arith.constant 0 : i32
    %c0_i32_0 = arith.constant 0 : i32
    %c0_i32_1 = arith.constant 0 : i32
    return %c0_i32, %c0_i32_0 : i32, i32
  }
  func.func @transform_5(%arg0: i32) -> (i32, i32) {
    %c0_i32 = arith.constant 0 : i32
    %c0_i32_0 = arith.constant 0 : i32
    %c0_i32_1 = arith.constant 0 : i32
    return %c0_i32, %c0_i32_0 : i32, i32
  }
}

</mosaic_0001>

<llo_original>
// kernel: tpu_custom_call.1
$region0: #{tpu_custom_call.1}
  #allocation0 [shape = 'u32[]', space=smem, size = 0x4, offset = 0x4, fixed_abs, tag = 'smem constant byte address 0x4 - core index']
  #allocation1 [shape = 'u32[72,128]{1,0:T(1,128)}', space=vmem, size = 0x9000, scoped, tag = 'internal scratch']
  #allocation2 [shape = 'f32[1]{0:T(128)S(6)}', space=smem, size = 0x200, scoped, tag = 'scoped memory for tpu_custom_call.1']
  #allocation3 [shape = 'f32[1]{0:T(128)S(6)}', space=smem, size = 0x200, scoped, tag = 'scoped memory for tpu_custom_call.1']
  %s0 = inlined_call_operand.<no memory space> [shape: f32[1], index: 0, kind: input, shape index: {}]
  %s1 = inlined_call_operand.<no memory space> [shape: f32[1], index: 1, kind: input, shape index: {}]
  %s2 = inlined_call_operand.hbm [shape: f32[16,128], index: 2, kind: input, shape index: {}]
  %s3 = inlined_call_operand.hbm [shape: f32[16,128], index: 3, kind: output, shape index: {0}]
  %s4 = inlined_call_operand.hbm [shape: f32[1,1], index: 4, kind: output, shape index: {1}]
  %s5 = inlined_call_operand.hbm [shape: f32[1,1], index: 5, kind: output, shape index: {2}]
  %6 = xla_tuple %s3, %s4, %s5
  %s7 = sld [smem:[#allocation0]]
  $region42: #{tpu_custom_call.1} parent=0
    _
  %s9 = ssub.s32 1, %s7
  %s10 = scalar_select 0, %s9, %s7
  %11 = sst [smem:[#allocation2]] %s0
  %12 = sst [smem:[#allocation3]] %s1
  $region1: #{tpu_custom_call.1} parent=0
    #allocation4 [shape = 'u8[8192]{0}', space=vmem, size = 0x2000, scoped, tag = 'input window, operand 2, single buffered']
    #allocation5 [shape = 's32[1]{0}', space=sflag, size = 0x4, scoped, tag = 'scoped memory for tpu_custom_call.1']
    #allocation6 [shape = 's32[1]{0}', space=sflag, size = 0x4, scoped, tag = 'scoped memory for tpu_custom_call.1']
    #allocation7 [shape = 'u8[8192]{0}', space=vmem, size = 0x2000, scoped, tag = 'output window, operand 0, single buffered']
    #allocation8 [shape = 'u8[512]{0}', space=vmem, size = 0x400, scoped, tag = 'output window, operand 1, single buffered']
    #allocation9 [shape = 's32[1]{0}', space=sflag, size = 0x4, scoped, tag = 'scoped memory for tpu_custom_call.1']
    #allocation10 [shape = 'u8[512]{0}', space=vmem, size = 0x400, scoped, tag = 'output window, operand 2, single buffered']
    %13 = vsyncpa [#allocation5], 0
    %14 = vsyncpa [#allocation6], 0
    %15 = vsyncpa [#allocation9], 0
    // Predicated region
    $region2: #{tpu_custom_call.1} parent=1 // pred_check
      _
    $region3: #{tpu_custom_call.1} parent=1 // pred_check_branch
      %17 = sbr.rel (0) target = $region5
    $region4: #{tpu_custom_call.1} parent=1 // pred_region
      _
    $region5: #{tpu_custom_call.1} parent=1 // pred_fallthru
      _
    // Predicated region
    $region6: #{tpu_custom_call.1} parent=1 // pred_check
      _
    $region7: #{tpu_custom_call.1} parent=1 // pred_check_branch
      %19 = sbr.rel (0) target = $region9
    $region8: #{tpu_custom_call.1} parent=1 // pred_region
      _
    $region9: #{tpu_custom_call.1} parent=1 // pred_fallthru
      _
    // Predicated region
    $region10: #{tpu_custom_call.1} parent=1 // pred_check
      _
    $region11: #{tpu_custom_call.1} parent=1 // pred_check_branch
      %21 = sbr.rel (0) target = $region13
    $region12: #{tpu_custom_call.1} parent=1 // pred_region
      %23 = vsyncadd [#allocation5], 0
      %s24 = sshll.u32 %s2, 4
      %s25 = int_to_ptr.hbm [resolvable:$true] %s24
      %s26 = sshll.u32 [#allocation4], 4
      %s27 = int_to_ptr.vmem [resolvable:$true] %s26
      %32 = dma.hbm_to_vmem [thread:$0]  %s25, 256, %s27, [#allocation5], 128, 128, 8
    $region13: #{tpu_custom_call.1} parent=1 // pred_fallthru
      _
    // Predicated region
    $region14: #{tpu_custom_call.1} parent=1 // pred_check
      _
    $region15: #{tpu_custom_call.1} parent=1 // pred_check_branch
      %34 = sbr.rel (0) target = $region17
    $region16: #{tpu_custom_call.1} parent=1 // pred_region
      %36 = dma.done [#allocation5], 256
    $region17: #{tpu_custom_call.1} parent=1 // pred_fallthru
      _
    %v37 = vld [vmem:[#allocation4] sm:$0xff]
    %v38 = vld [vmem:[#allocation4 + $0x8] sm:$0xff]
    %v39 = vmin.f32 %v37, %v38
    %v40 = vrot.slane %v39, 4
    %v41 = vmin.f32 %v39, %v40
    %v42 = vrot.slane %v41, 2
    %v43 = vmin.f32 %v41, %v42
    %v44 = vrot.slane %v43, 1
    %v45 = vmin.f32 %v43, %v44
    %46 = vmin.xlane.f32.xlu0 %v45
    %v47 = vpop.xlane.xlu0 %46
    %v48 = vmax.f32 %v37, %v38
    %v49 = vrot.slane %v48, 4
    %v50 = vmax.f32 %v48, %v49
    %v51 = vrot.slane %v50, 2
    %v52 = vmax.f32 %v50, %v51
    %v53 = vrot.slane %v52, 1
    %v54 = vmax.f32 %v52, %v53
    %55 = vmax.xlane.f32.xlu0 %v54
    %v56 = vpop.xlane.xlu0 %55
    %s57 = sld [smem:[#allocation2]]
    %s58 = sld [smem:[#allocation3]]
    %p59 = scmp.eq.f32.partialorder %s57, %s58
    %s60 = scalar_select %p59, 1, 0
    %s61 = scvt.s32.f32 %s60
    %v62 = vstv %s61
    %v63 = vmul.f32 %v62, %v47
    %s64 = ssub.f32 1.0, %s61
    %v65 = vstv %s57
    %v66 = vsub.f32 %v47, %v65
    %v67 = vmul.f32 %v66, 0.01
    %v68 = vadd.f32 %v65, %v67
    %v69 = vstv %s64
    %v70 = vmul.f32 %v69, %v68
    %v71 = vadd.f32 %v63, %v70
    %v72 = vmul.f32 %v62, %v56
    %v73 = vstv %s58
    %v74 = vsub.f32 %v56, %v73
    %v75 = vmul.f32 %v74, 0.01
    %v76 = vadd.f32 %v73, %v75
    %v77 = vmul.f32 %v69, %v76
    %v78 = vadd.f32 %v72, %v77
    %v79 = vmin.f32 %v71, 0.0
    %v80 = vmax.f32 %v78, 0.0
    %v81 = vsub.f32 0.0, %v79
    %v82 = vmax.f32 %v81, %v80
    %vm83 = vcmp.eq.f32.partialorder %v80, %v79
    %v84 = vrcp.pop 127.5
    %v85 = vmul.f32 127.5, %v84
    %v86 = vsub.f32 1.0, %v85
    %v87 = vmul.f32 %v84, %v86
    %v88 = vadd.f32 %v84, %v87
    %vm89 = vweird.f32 %v84
    %v90 = vsel %vm89, %v84, %v88
    %v91 = vmul.f32 %v82, %v90
    %v92 = vmax.f32 %v91, 1e-08
    %v93 = vsel %vm83, 1.0, %v92
    %v94 = vrcp.pop %v93
    %v95 = vmul.f32 %v93, %v94
    %v96 = vsub.f32 1.0, %v95
    %v97 = vmul.f32 %v94, %v96
    %v98 = vadd.f32 %v94, %v97
    %vm99 = vweird.f32 %v93
    %vm100 = vweird.f32 %v94
    %vm101 = vmor %vm99, %vm100
    %v102 = vsel %vm101, %v94, %v98
    %v103 = vand.u32 2147483647, %v93
    %vm104 = vcmp.eq.f32.partialorder %v103, 8.507059e+37
    %v105 = vand.u32 %v93, 2147483648
    %v106 = vor.u32 1.1754944e-38, %v105
    %v107 = vsel %vm104, %v106, %v102
    %v108 = vmul.f32 1.0, %v107
    %v109 = vmul.f32 %v37, %v108
    %v110 = vmul.f32 %v38, %v108
    %v111 = vround.ne.pseudo %v109
    %v112 = vround.ne.pseudo %v110
    %v113 = vmax.f32 %v111, -128.0
    %v114 = vmax.f32 %v112, -128.0
    %v115 = vmin.f32 %v113, 127.0
    %v116 = vmin.f32 %v114, 127.0
    %v117 = vmul.f32 %v115, %v93
    %v118 = vmul.f32 %v116, %v93
    %119 = vst [vmem:[#allocation7] sm:$0xff] %v117
    %120 = vst [vmem:[#allocation7 + $0x8] sm:$0xff] %v118
    %vm121 = vcmask 0
    %122 = vst.msk [vmem:[#allocation8] sm:$0x1] %vm121, %v71
    %123 = vst.msk [vmem:[#allocation10] sm:$0x1] %vm121, %v78
    // Predicated region
    $region18: #{tpu_custom_call.1} parent=1 // pred_check
      _
    $region19: #{tpu_custom_call.1} parent=1 // pred_check_branch
      %125 = sbr.rel (0) target = $region21
    $region20: #{tpu_custom_call.1} parent=1 // pred_region
      %127 = vsyncadd [#allocation6], 0
      %s128 = sshll.u32 [#allocation7], 4
      %s129 = int_to_ptr.vmem [resolvable:$true] %s128
      %s130 = sshll.u32 %s3, 4
      %s131 = int_to_ptr.hbm [resolvable:$true] %s130
      %136 = dma.vmem_to_hbm [thread:$0]  %s129, 256, %s131, [#allocation6], 128, 128, 8
    $region21: #{tpu_custom_call.1} parent=1 // pred_fallthru
      _
    // Predicated region
    $region22: #{tpu_custom_call.1} parent=1 // pred_check
      _
    $region23: #{tpu_custom_call.1} parent=1 // pred_check_branch
      %138 = sbr.rel (0) target = $region25
    $region24: #{tpu_custom_call.1} parent=1 // pred_region
      %140 = vsyncadd [#allocation9], 0
      %s142 = sshll.u32 [#allocation8], 4
      %s143 = int_to_ptr.vmem [resolvable:$true] %s142
      %s144 = sshll.u32 %s4, 4
      %s145 = int_to_ptr.hbm [resolvable:$true] %s144
      %147 = dma.vmem_to_hbm [thread:$0]  %s143, 16, %s145, [#allocation9]
    $region25: #{tpu_custom_call.1} parent=1 // pred_fallthru
      _
    // Predicated region
    $region26: #{tpu_custom_call.1} parent=1 // pred_check
      _
    $region27: #{tpu_custom_call.1} parent=1 // pred_check_branch
      %149 = sbr.rel (0) target = $region29
    $region28: #{tpu_custom_call.1} parent=1 // pred_region
      %151 = vsyncadd [#allocation9], 0
      %s153 = sshll.u32 [#allocation10], 4
      %s154 = int_to_ptr.vmem [resolvable:$true] %s153
      %s155 = sshll.u32 %s5, 4
      %s156 = int_to_ptr.hbm [resolvable:$true] %s155
      %158 = dma.vmem_to_hbm [thread:$0]  %s154, 16, %s156, [#allocation9]
    $region29: #{tpu_custom_call.1} parent=1 // pred_fallthru
      _
    // Predicated region
    $region30: #{tpu_custom_call.1} parent=1 // pred_check
      _
    $region31: #{tpu_custom_call.1} parent=1 // pred_check_branch
      %160 = sbr.rel (0) target = $region33
    $region32: #{tpu_custom_call.1} parent=1 // pred_region
      %162 = dma.done [#allocation6], 256
    $region33: #{tpu_custom_call.1} parent=1 // pred_fallthru
      _
    // Predicated region
    $region34: #{tpu_custom_call.1} parent=1 // pred_check
      _
    $region35: #{tpu_custom_call.1} parent=1 // pred_check_branch
      %164 = sbr.rel (0) target = $region37
    $region36: #{tpu_custom_call.1} parent=1 // pred_region
      %166 = dma.done [#allocation9], 16
    $region37: #{tpu_custom_call.1} parent=1 // pred_fallthru
      _
    // Predicated region
    $region38: #{tpu_custom_call.1} parent=1 // pred_check
      _
    $region39: #{tpu_custom_call.1} parent=1 // pred_check_branch
      %168 = sbr.rel (0) target = $region41
    $region40: #{tpu_custom_call.1} parent=1 // pred_region
      %170 = dma.done [#allocation9], 16
    $region41: #{tpu_custom_call.1} parent=1 // pred_fallthru
      _
    %171 = vsyncpa [#allocation5], 1
    %172 = vsyncpa [#allocation6], 1
    %173 = vsyncpa [#allocation9], 1

</llo_original>
